<compile_context>
chip_gen: v5e
topology: v5e:2x2
jax: 0.10.0
libtpu: 0.0.40
codegen_flags: <defaults>
</compile_context>

<pallas_src>
import functools
import math

import jax
import jax.numpy as jnp
from jax.experimental import pallas as pl
from jax.experimental.pallas import tpu as pltpu

BN_EPS = 1e-5
_VMEM_LIMIT_BYTES = 48 * 1024 * 1024   # explicit scoped-VMEM limit (safe < v7x 64 MiB physical)
_VMEM_BUDGET_BYTES = 32 * 1024 * 1024  # conservative planning budget for tile/residency choices


def _round_up(v, m):
    return (v + m - 1) // m * m


# --------------------------------------------------------------------------
# Kernel 1: tiled  h_pre = (A_hat @ x) @ W   (+ per-row-tile BN partial stats).
# Grid = (row tiles [parallel], k tiles [arbitrary, reduction last]).
# --------------------------------------------------------------------------
def _gcn_agg_kernel(*refs, x_resident, tk, with_stats):
    if with_stats:
        a_ref, x_ref, w_ref, h_ref, sum_ref, ssq_ref, acc_ref = refs
    else:
        a_ref, x_ref, w_ref, h_ref, acc_ref = refs
    k = pl.program_id(1)

    if x_resident:
        start = pl.multiple_of(k * tk, tk)
        xs = x_ref[pl.ds(start, tk), :]          # slice the VMEM-resident x
    else:
        xs = x_ref[...]                          # streamed (tk, din_p) tile

    # bf16 operands, f32 MXU accumulation (adjacency bytes dominate HBM traffic).
    prod = jnp.dot(a_ref[...], xs, preferred_element_type=jnp.float32)

    @pl.when(k == 0)
    def _():
        acc_ref[...] = prod                      # write, not zero-init + add

    @pl.when(k > 0)
    def _():
        acc_ref[...] += prod

    @pl.when(k == pl.num_programs(1) - 1)
    def _():
        h = jnp.dot(acc_ref[...], w_ref[...],
                    preferred_element_type=jnp.float32)   # [tm, dout_p]
        h_ref[...] = h
        if with_stats:
            # Fused sum + sum-of-squares (one reduction sweep) for cross-tile
            # BatchNorm statistics; broadcast to 8 sublanes for aligned stores.
            s = jnp.sum(h, axis=0, keepdims=True)
            q = jnp.sum(h * h, axis=0, keepdims=True)
            sum_ref[...] = jnp.broadcast_to(s, (8, h.shape[1]))[None]
            ssq_ref[...] = jnp.broadcast_to(q, (8, h.shape[1]))[None]


# --------------------------------------------------------------------------
# Kernel 2: h = relu(h_pre * scale + shift) (+ x residual), row-parallel.
# scale/shift fold BatchNorm gamma/beta/mean/var and the GCNConv bias.
# --------------------------------------------------------------------------
def _gcn_post_kernel(*refs, residual):
    if residual:
        h_ref, scale_ref, shift_ref, x_ref, o_ref = refs
    else:
        h_ref, scale_ref, shift_ref, o_ref = refs
    h = h_ref[...] * scale_ref[...] + shift_ref[...]
    h = jnp.maximum(h, 0.0)
    if residual:
        h = h + x_ref[...]
    o_ref[...] = h


def gcn_norm_adj_padded(edge_index, num_nodes, n_pad, dtype=jnp.bfloat16):
    """Padded dense A_hat = D^-1/2 A D^-1/2 (PyG gcn_norm, add_self_loops=False).

    Builds the padded matrix directly (one f32 scatter-add, one cast) to avoid
    the f32 -> padded f32 -> bf16 triple materialization.
    """
    src, dst = edge_index[0], edge_index[1]
    deg = jnp.zeros((num_nodes,), jnp.float32).at[dst].add(1.0)
    dinv = jnp.where(deg > 0, jax.lax.rsqrt(deg), 0.0)
    norm = dinv[src] * dinv[dst]
    a = jnp.zeros((n_pad, n_pad), jnp.float32).at[dst, src].add(norm)
    return a.astype(dtype)


def _agg_vmem_bytes(tm, tk, din_p, dout_p, n_pad, x_resident, with_stats):
    """Conservative per-pipeline VMEM estimate for kernel 1 (double-buffered)."""
    b = 2 * tm * tk * 2                          # A tile (bf16) x 2 buffers
    if x_resident:
        b += 2 * n_pad * din_p * 2               # resident x (counted x2, conservative)
    else:
        b += 2 * tk * din_p * 2                  # streamed x tile
    b += 2 * din_p * dout_p * 4                  # W
    b += 2 * tm * dout_p * 4                     # h_pre output
    if with_stats:
        b += 2 * 2 * 8 * dout_p * 4              # sum / ssq outputs
    b += tm * din_p * 4                          # accumulator scratch
    return b


def gcn_layer(x, edge_index, params, *, batch_norm=True, residual=True,
              tm=512, tk=512):
    """x: [N, in_dim] f32, edge_index: [2, E] int32 (row 0 = src, row 1 = dst)."""
    n, din = x.shape
    dout = params["w"].shape[1]
    if din != dout:
        residual = False

    din_p = _round_up(din, 128)
    dout_p = _round_up(dout, 128)
    n_p128 = _round_up(n, 128)

    # ---- tile selection: start large, clamp to padded N and VMEM budget ----
    tm = max(128, min(_round_up(tm, 128), n_p128))
    tk = max(128, min(_round_up(tk, 128), n_p128))
    while (_agg_vmem_bytes(tm, tk, din_p, dout_p, 0, False, batch_norm)
           > _VMEM_BUDGET_BYTES and max(tm, tk) > 128):
        if tk >= tm:
            tk = max(128, (tk // 2) // 128 * 128)
        else:
            tm = max(128, (tm // 2) // 128 * 128)

    n_pad = _round_up(n, math.lcm(tm, tk))
    n_rt = n_pad // tm
    n_kt = n_pad // tk

    # Keep x VMEM-resident (single DMA, no per-row-tile re-streaming) if it fits.
    x_resident = (_agg_vmem_bytes(tm, tk, din_p, dout_p, n_pad, True, batch_norm)
                  <= _VMEM_BUDGET_BYTES)

    # ---- inputs: padded bf16 adjacency / x built directly, f32 params -------
    a_b = gcn_norm_adj_padded(edge_index, n, n_pad, jnp.bfloat16)
    x_b = jnp.zeros((n_pad, din_p), jnp.bfloat16).at[:n, :din].set(
        x.astype(jnp.bfloat16))
    w_p = jnp.zeros((din_p, dout_p), jnp.float32).at[:din, :dout].set(params["w"])
    b_p = jnp.zeros((1, dout_p), jnp.float32).at[:, :dout].set(
        params["b"].reshape(1, dout))
    g_p = jnp.ones((1, dout_p), jnp.float32).at[:, :dout].set(
        params["gamma"].reshape(1, dout))
    be_p = jnp.zeros((1, dout_p), jnp.float32).at[:, :dout].set(
        params["beta"].reshape(1, dout))

    flops = 2.0 * n_pad * n_pad * din_p + 2.0 * n_pad * din_p * dout_p
    bytes_accessed = (n_pad * n_pad * 2
                      + n_pad * din_p * 2 * (1 if x_resident else n_rt)
                      + din_p * dout_p * 4
                      + n_pad * dout_p * 4)
    if batch_norm:
        bytes_accessed += 2 * n_rt * 8 * dout_p * 4
    cost = pl.CostEstimate(flops=int(flops), transcendentals=0,
                           bytes_accessed=int(bytes_accessed))

    if x_resident:
        x_spec = pl.BlockSpec((n_pad, din_p), lambda i, k: (0, 0))   # resident
    else:
        x_spec = pl.BlockSpec((tk, din_p), lambda i, k: (k, 0))      # streamed

    out_shape_1 = [jax.ShapeDtypeStruct((n_pad, dout_p), jnp.float32)]
    out_specs_1 = [pl.BlockSpec((tm, dout_p), lambda i, k: (i, 0))]
    if batch_norm:
        out_shape_1 += [jax.ShapeDtypeStruct((n_rt, 8, dout_p), jnp.float32)] * 2
        out_specs_1 += [pl.BlockSpec((1, 8, dout_p), lambda i, k: (i, 0, 0))] * 2

    agg_out = pl.pallas_call(
        functools.partial(_gcn_agg_kernel, x_resident=x_resident, tk=tk,
                          with_stats=batch_norm),
        out_shape=tuple(out_shape_1),
        grid_spec=pltpu.PrefetchScalarGridSpec(
            num_scalar_prefetch=0,
            grid=(n_rt, n_kt),
            in_specs=[
                pl.BlockSpec((tm, tk), lambda i, k: (i, k)),          # A_hat tile
                x_spec,                                               # x
                pl.BlockSpec((din_p, dout_p), lambda i, k: (0, 0)),   # W (resident)
            ],
            out_specs=tuple(out_specs_1),
            scratch_shapes=[pltpu.VMEM((tm, din_p), jnp.float32)],
        ),
        compiler_params=pltpu.CompilerParams(
            dimension_semantics=("parallel", "arbitrary"),
            vmem_limit_bytes=_VMEM_LIMIT_BYTES),
        cost_estimate=cost,
    )(a_b, x_b, w_p)

    if batch_norm:
        h_pre, psum, pssq = agg_out
    else:
        (h_pre,) = agg_out

    # ---- tiny JAX glue: combine per-tile stats -> folded BN scale/shift ----
    # Padded rows/cols of h_pre are exactly 0, so summing all partials and
    # dividing by the real N gives the reference (train-mode, biased-var) BN.
    if batch_norm:
        inv_n = 1.0 / float(n)
        col_sum = jnp.sum(psum[:, 0, :], axis=0)
        col_ssq = jnp.sum(pssq[:, 0, :], axis=0)
        mean = col_sum * inv_n
        var = jnp.maximum(col_ssq * inv_n - mean * mean, 0.0)
        inv_std = jax.lax.rsqrt(var + BN_EPS)
        # The GCNConv bias cancels under train-mode batch-stat BN (shift
        # invariance). NOTE: NOT valid for eval-mode running-stat BN.
        scale = (g_p[0] * inv_std)[None, :]
        shift = (be_p[0] - mean * g_p[0] * inv_std)[None, :]
    else:
        scale = jnp.ones((1, dout_p), jnp.float32)
        shift = b_p

    # ---- kernel 2 row block: as large as divides n_pad (<= 2048) and fits ---
    def _post_vmem_bytes(t):
        streams = 3 if residual else 2           # h in + out (+ residual x)
        return streams * 2 * t * dout_p * 4 + 2 * 2 * 2 * dout_p * 4

    tm_post = tm
    d = (min(2048, n_pad) // 128) * 128
    while d >= 128:
        if n_pad % d == 0 and _post_vmem_bytes(d) <= _VMEM_BUDGET_BYTES:
            tm_post = d
            break
        d -= 128
    n_rt_post = n_pad // tm_post

    post_inputs = [h_pre, scale, shift]
    post_specs = [
        pl.BlockSpec((tm_post, dout_p), lambda i: (i, 0)),
        pl.BlockSpec((1, dout_p), lambda i: (0, 0)),
        pl.BlockSpec((1, dout_p), lambda i: (0, 0)),
    ]
    if residual:
        # f32 residual (matches the module's f32 h_in + h).
        x_res = jnp.zeros((n_pad, dout_p), jnp.float32).at[:n, :din].set(x)
        post_inputs.append(x_res)
        post_specs.append(pl.BlockSpec((tm_post, dout_p), lambda i: (i, 0)))

    out_p = pl.pallas_call(
        functools.partial(_gcn_post_kernel, residual=residual),
        out_shape=jax.ShapeDtypeStruct((n_pad, dout_p), jnp.float32),
        grid_spec=pltpu.PrefetchScalarGridSpec(
            num_scalar_prefetch=0,
            grid=(n_rt_post,),
            in_specs=post_specs,
            out_specs=pl.BlockSpec((tm_post, dout_p), lambda i: (i, 0)),
        ),
        compiler_params=pltpu.CompilerParams(
            dimension_semantics=("parallel",),
            vmem_limit_bytes=_VMEM_LIMIT_BYTES),
    )(*post_inputs)

    return out_p[:n, :dout]


def _reference(x, a_hat, params, *, batch_norm=True, residual=True):
    """Pure-JAX GCNLayer forward (train-mode BN). Matmul operands rounded to
    bf16 to match the kernel's MXU operand precision for a tight check."""
    din = x.shape[1]
    dout = params["w"].shape[1]
    if din != dout:
        residual = False
    a_b = a_hat.astype(jnp.bfloat16).astype(jnp.float32)
    x_b = x.astype(jnp.bfloat16).astype(jnp.float32)
    h = (a_b @ x_b) @ params["w"] + params["b"][None, :]
    if batch_norm:
        m = h.mean(0, keepdims=True)
        v = ((h - m) ** 2).mean(0, keepdims=True)
        h = (h - m) * jax.lax.rsqrt(v + BN_EPS) * params["gamma"][None, :] \
            + params["beta"][None, :]
    h = jnp.maximum(h, 0.0)
    if residual:
        h = x + h
    return h


if __name__ == "__main__":
    key = jax.random.PRNGKey(0)
    N, E = 256, 1024
    in_dim = out_dim = 32          # equal -> residual active

    ks = jax.random.split(key, 6)
    x = jax.random.normal(ks[0], (N, in_dim), dtype=jnp.float32)
    src = jax.random.randint(ks[1], (E,), 0, N, dtype=jnp.int32)
    dst = jax.random.randint(ks[2], (E,), 0, N, dtype=jnp.int32)
    edge_index = jnp.stack([src, dst], axis=0)

    params = {
        "w": jax.random.normal(ks[3], (in_dim, out_dim), jnp.float32) * 0.1,
        "b": jax.random.normal(ks[4], (out_dim,), jnp.float32) * 0.1,
        "gamma": 1.0 + 0.1 * jax.random.normal(ks[5], (out_dim,), jnp.float32),
        "beta": jnp.full((out_dim,), 0.05, jnp.float32),
    }

    out = gcn_layer(x, edge_index, params, batch_norm=True, residual=True)
    out = jax.block_until_ready(out)

    a_hat = gcn_norm_adj_padded(edge_index, N, N, jnp.float32)
    ref = _reference(x, a_hat, params, batch_norm=True, residual=True)

    assert out.shape == (N, out_dim)
    err = float(jnp.max(jnp.abs(out - ref)))
    assert jnp.allclose(out, ref, atol=2e-3, rtol=2e-3), err

    print("KERNEL_OK")
</pallas_src>

<mosaic_0001>
module attributes {stable_mosaic.version = 11 : i64} {
  func.func @_gcn_agg_kernel(%arg0: i32, %arg1: i32, %arg2: memref<256x256xbf16, #tpu.memory_space<vmem>>, %arg3: memref<256x128xbf16, #tpu.memory_space<vmem>>, %arg4: memref<128x128xf32, #tpu.memory_space<vmem>>, %arg5: memref<256x128xf32, #tpu.memory_space<vmem>>, %arg6: memref<1x8x128xf32, #tpu.memory_space<vmem>>, %arg7: memref<1x8x128xf32, #tpu.memory_space<vmem>>, %arg8: memref<256x128xf32, #tpu.memory_space<vmem>>) attributes {dimension_semantics = [#tpu.dimension_semantics<parallel>, #tpu.dimension_semantics<arbitrary>], iteration_bounds = array<i64: 1, 1>, scalar_prefetch = 0 : i64, scratch_operands = 1 : i64, tpu.core_type = #tpu.core_type<tc>, window_params = [{transform_indices = @transform_0, window_bounds = array<i64: 256, 256>}, {pipeline_mode = #tpu.pipeline_mode<synchronous>, transform_indices = @transform_1, window_bounds = array<i64: 256, 128>}, {pipeline_mode = #tpu.pipeline_mode<synchronous>, transform_indices = @transform_2, window_bounds = array<i64: 128, 128>}, {transform_indices = @transform_3, window_bounds = array<i64: 256, 128>}, {transform_indices = @transform_4, window_bounds = array<i64: 1, 8, 128>}, {transform_indices = @transform_5, window_bounds = array<i64: 1, 8, 128>}]} {
    %c256_i32 = arith.constant 256 : i32
    %0 = arith.muli %arg1, %c256_i32 : i32
    %1 = tpu.assume_multiple %0, 256 : i32
    %2 = arith.index_cast %1 : i32 to index
    %c0 = arith.constant 0 : index
    %3 = vector.load %arg3[%2, %c0] : memref<256x128xbf16, #tpu.memory_space<vmem>>, vector<256x128xbf16>
    %c0_0 = arith.constant 0 : index
    %c0_1 = arith.constant 0 : index
    %4 = vector.load %arg2[%c0_0, %c0_1] : memref<256x256xbf16, #tpu.memory_space<vmem>>, vector<256x256xbf16>
    %cst = arith.constant dense<0.000000e+00> : vector<256x128xf32>
    %5 = tpu.matmul %4, %3, %cst {dimension_numbers = #tpu.dot_dimension_numbers<[1], [0], [0], [1], [0, 0, 1, 1], [], []>} : vector<256x256xbf16>, vector<256x128xbf16>, vector<256x128xf32> -> vector<256x128xf32>
    %c0_i32 = arith.constant 0 : i32
    %6 = arith.cmpi eq, %arg1, %c0_i32 : i32
    %7 = arith.extui %6 : i1 to i32
    %c0_i32_2 = arith.constant 0 : i32
    %8 = arith.cmpi ne, %7, %c0_i32_2 : i32
    scf.if %8 {
      %c0_7 = arith.constant 0 : index
      %c0_8 = arith.constant 0 : index
      %15 = vector.load %arg8[%c0_7, %c0_8] : memref<256x128xf32, #tpu.memory_space<vmem>>, vector<256x128xf32>
      tpu.vector_store %arg8[%c0_7, %c0_8], %5 {strides = array<i32>} : memref<256x128xf32, #tpu.memory_space<vmem>>, vector<256x128xf32>,
    } else {
    }
    %c0_i32_3 = arith.constant 0 : i32
    %9 = arith.cmpi sgt, %arg1, %c0_i32_3 : i32
    %10 = arith.extui %9 : i1 to i32
    %c0_i32_4 = arith.constant 0 : i32
    %11 = arith.cmpi ne, %10, %c0_i32_4 : i32
    scf.if %11 {
      %c0_7 = arith.constant 0 : index
      %c0_8 = arith.constant 0 : index
      %15 = vector.load %arg8[%c0_7, %c0_8] : memref<256x128xf32, #tpu.memory_space<vmem>>, vector<256x128xf32>
      %16 = arith.addf %15, %5 : vector<256x128xf32>
      %c0_9 = arith.constant 0 : index
      %c0_10 = arith.constant 0 : index
      %17 = vector.load %arg8[%c0_9, %c0_10] : memref<256x128xf32, #tpu.memory_space<vmem>>, vector<256x128xf32>
      tpu.vector_store %arg8[%c0_9, %c0_10], %16 {strides = array<i32>} : memref<256x128xf32, #tpu.memory_space<vmem>>, vector<256x128xf32>,
    } else {
    }
    %c0_i32_5 = arith.constant 0 : i32
    %12 = arith.cmpi eq, %arg1, %c0_i32_5 : i32
    %13 = arith.extui %12 : i1 to i32
    %c0_i32_6 = arith.constant 0 : i32
    %14 = arith.cmpi ne, %13, %c0_i32_6 : i32
    scf.if %14 {
      %c0_7 = arith.constant 0 : index
      %c0_8 = arith.constant 0 : index
      %15 = vector.load %arg8[%c0_7, %c0_8] : memref<256x128xf32, #tpu.memory_space<vmem>>, vector<256x128xf32>
      %c0_9 = arith.constant 0 : index
      %c0_10 = arith.constant 0 : index
      %16 = vector.load %arg4[%c0_9, %c0_10] : memref<128x128xf32, #tpu.memory_space<vmem>>, vector<128x128xf32>
      %cst_11 = arith.constant dense<0.000000e+00> : vector<256x128xf32>
      %17 = tpu.matmul %15, %16, %cst_11 {dimension_numbers = #tpu.dot_dimension_numbers<[1], [0], [0], [1], [0, 0, 1, 1], [], []>} : vector<256x128xf32>, vector<128x128xf32>, vector<256x128xf32> -> vector<256x128xf32>
      %c0_12 = arith.constant 0 : index
      %c0_13 = arith.constant 0 : index
      %18 = vector.load %arg5[%c0_12, %c0_13] : memref<256x128xf32, #tpu.memory_space<vmem>>, vector<256x128xf32>
      tpu.vector_store %arg5[%c0_12, %c0_13], %17 {strides = array<i32>} : memref<256x128xf32, #tpu.memory_space<vmem>>, vector<256x128xf32>,
      %cst_14 = arith.constant dense<0.000000e+00> : vector<128xf32>
      %19 = vector.multi_reduction <add>, %17, %cst_14 [0] : vector<256x128xf32> to vector<128xf32>
      %20 = vector.shape_cast %19 : vector<128xf32> to vector<1x128xf32>
      %21 = arith.mulf %17, %17 : vector<256x128xf32>
      %cst_15 = arith.constant dense<0.000000e+00> : vector<128xf32>
      %22 = vector.multi_reduction <add>, %21, %cst_15 [0] : vector<256x128xf32> to vector<128xf32>
      %23 = vector.shape_cast %22 : vector<128xf32> to vector<1x128xf32>
      %24 = vector.shape_cast %20 : vector<1x128xf32> to vector<1x128xf32>
      %25 = vector.broadcast %24 : vector<1x128xf32> to vector<8x128xf32>
      %26 = vector.shape_cast %25 : vector<8x128xf32> to vector<1x8x128xf32>
      %c0_16 = arith.constant 0 : index
      %c0_17 = arith.constant 0 : index
      %c0_18 = arith.constant 0 : index
      %27 = vector.load %arg6[%c0_16, %c0_17, %c0_18] : memref<1x8x128xf32, #tpu.memory_space<vmem>>, vector<1x8x128xf32>
      tpu.vector_store %arg6[%c0_16, %c0_17, %c0_18], %26 {strides = array<i32>} : memref<1x8x128xf32, #tpu.memory_space<vmem>>, vector<1x8x128xf32>,
      %28 = vector.shape_cast %23 : vector<1x128xf32> to vector<1x128xf32>
      %29 = vector.broadcast %28 : vector<1x128xf32> to vector<8x128xf32>
      %30 = vector.shape_cast %29 : vector<8x128xf32> to vector<1x8x128xf32>
      %c0_19 = arith.constant 0 : index
      %c0_20 = arith.constant 0 : index
      %c0_21 = arith.constant 0 : index
      %31 = vector.load %arg7[%c0_19, %c0_20, %c0_21] : memref<1x8x128xf32, #tpu.memory_space<vmem>>, vector<1x8x128xf32>
      tpu.vector_store %arg7[%c0_19, %c0_20, %c0_21], %30 {strides = array<i32>} : memref<1x8x128xf32, #tpu.memory_space<vmem>>, vector<1x8x128xf32>,
    } else {
    }
    return
  }
  func.func @transform_0(%arg0: i32, %arg1: i32) -> (i32, i32) {
    %c0_i32 = arith.constant 0 : i32
    return %arg0, %arg1 : i32, i32
  }
  func.func @transform_1(%arg0: i32, %arg1: i32) -> (i32, i32) {
    %c0_i32 = arith.constant 0 : i32
    %c0_i32_0 = arith.constant 0 : i32
    %c0_i32_1 = arith.constant 0 : i32
    return %c0_i32, %c0_i32_0 : i32, i32
  }
  func.func @transform_2(%arg0: i32, %arg1: i32) -> (i32, i32) {
    %c0_i32 = arith.constant 0 : i32
    %c0_i32_0 = arith.constant 0 : i32
    %c0_i32_1 = arith.constant 0 : i32
    return %c0_i32, %c0_i32_0 : i32, i32
  }
  func.func @transform_3(%arg0: i32, %arg1: i32) -> (i32, i32) {
    %c0_i32 = arith.constant 0 : i32
    %c0_i32_0 = arith.constant 0 : i32
    return %arg0, %c0_i32 : i32, i32
  }
  func.func @transform_4(%arg0: i32, %arg1: i32) -> (i32, i32, i32) {
    %c0_i32 = arith.constant 0 : i32
    %c0_i32_0 = arith.constant 0 : i32
    %c0_i32_1 = arith.constant 0 : i32
    return %arg0, %c0_i32, %c0_i32_0 : i32, i32, i32
  }
  func.func @transform_5(%arg0: i32, %arg1: i32) -> (i32, i32, i32) {
    %c0_i32 = arith.constant 0 : i32
    %c0_i32_0 = arith.constant 0 : i32
    %c0_i32_1 = arith.constant 0 : i32
    return %arg0, %c0_i32, %c0_i32_0 : i32, i32, i32
  }
}

</mosaic_0001>

<llo_original>
// kernel: tpu_custom_call.1
$region0: #{tpu_custom_call.1}
  #allocation0 [shape = 'u32[]', space=smem, size = 0x4, offset = 0x4, fixed_abs, tag = 'smem constant byte address 0x4 - core index']
  #allocation1 [shape = 'u32[72,128]{1,0:T(1,128)}', space=vmem, size = 0x9000, scoped, tag = 'internal scratch']
  #allocation2 [shape = 'f32[256,128]{1,0:T(8,128)}', space=vmem, size = 0x20000, scoped, tag = 'scratch operand']
  %s0 = inlined_call_operand.hbm [shape: bf16[256,256], index: 0, kind: input, shape index: {}]
  %s1 = inlined_call_operand.hbm [shape: bf16[256,128], index: 1, kind: input, shape index: {}]
  %s2 = inlined_call_operand.hbm [shape: f32[128,128], index: 2, kind: input, shape index: {}]
  %s3 = inlined_call_operand.hbm [shape: f32[256,128], index: 3, kind: output, shape index: {0}]
  %s4 = inlined_call_operand.hbm [shape: f32[1,8,128], index: 4, kind: output, shape index: {1}]
  %s5 = inlined_call_operand.hbm [shape: f32[1,8,128], index: 5, kind: output, shape index: {2}]
  %6 = xla_tuple %s3, %s4, %s5
  %s7 = sld [smem:[#allocation0]]
  $region62: #{tpu_custom_call.1} parent=0
    _
  %s9 = ssub.s32 1, %s7
  %s10 = scalar_select 0, %s9, %s7
  $region1: #{tpu_custom_call.1} parent=0
    #allocation3 [shape = 'u8[131072]{0}', space=vmem, size = 0x20000, scoped, tag = 'input window, operand 0, single buffered']
    #allocation4 [shape = 's32[1]{0}', space=sflag, size = 0x4, scoped, tag = 'scoped memory for tpu_custom_call.1']
    #allocation5 [shape = 's32[1]{0}', space=sflag, size = 0x4, scoped, tag = 'scoped memory for tpu_custom_call.1']
    #allocation6 [shape = 'u8[65536]{0}', space=vmem, size = 0x10000, scoped, tag = 'input window, operand 1, single buffered']
    #allocation7 [shape = 's32[1]{0}', space=sflag, size = 0x4, scoped, tag = 'scoped memory for tpu_custom_call.1']
    #allocation8 [shape = 'u8[65536]{0}', space=vmem, size = 0x10000, scoped, tag = 'input window, operand 2, single buffered']
    #allocation9 [shape = 'u8[131072]{0}', space=vmem, size = 0x20000, scoped, tag = 'output window, operand 0, single buffered']
    #allocation10 [shape = 'u8[4096]{0}', space=vmem, size = 0x1000, scoped, tag = 'output window, operand 1, single buffered']
    #allocation11 [shape = 's32[1]{0}', space=sflag, size = 0x4, scoped, tag = 'scoped memory for tpu_custom_call.1']
    #allocation12 [shape = 'u8[4096]{0}', space=vmem, size = 0x1000, scoped, tag = 'output window, operand 2, single buffered']
    %11 = vsyncpa [#allocation4], 0
    %12 = vsyncpa [#allocation7], 0
    %13 = vsyncpa [#allocation5], 0
    %14 = vsyncpa [#allocation11], 0
    // Predicated region
    $region2: #{tpu_custom_call.1} parent=1 // pred_check
      _
    $region3: #{tpu_custom_call.1} parent=1 // pred_check_branch
      %16 = sbr.rel (0) target = $region5
    $region4: #{tpu_custom_call.1} parent=1 // pred_region
      %18 = vsyncadd [#allocation4], 0
      %s19 = sshll.u32 %s0, 4
      %s20 = int_to_ptr.hbm [resolvable:$true] %s19
      %s21 = sshll.u32 [#allocation3], 4
      %s22 = int_to_ptr.vmem [resolvable:$true] %s21
      %27 = dma.hbm_to_vmem [thread:$0]  %s20, 4096, %s22, [#allocation4], 128, 128, 8
    $region5: #{tpu_custom_call.1} parent=1 // pred_fallthru
      _
    // Predicated region
    $region6: #{tpu_custom_call.1} parent=1 // pred_check
      _
    $region7: #{tpu_custom_call.1} parent=1 // pred_check_branch
      %29 = sbr.rel (0) target = $region9
    $region8: #{tpu_custom_call.1} parent=1 // pred_region
      %31 = vsyncadd [#allocation7], 0
      %s32 = sshll.u32 %s1, 4
      %s33 = int_to_ptr.hbm [resolvable:$true] %s32
      %s34 = sshll.u32 [#allocation6], 4
      %s35 = int_to_ptr.vmem [resolvable:$true] %s34
      %40 = dma.hbm_to_vmem [thread:$0]  %s33, 2048, %s35, [#allocation7], 64, 64, 4
    $region9: #{tpu_custom_call.1} parent=1 // pred_fallthru
      _
    // Predicated region
    $region10: #{tpu_custom_call.1} parent=1 // pred_check
      _
    $region11: #{tpu_custom_call.1} parent=1 // pred_check_branch
      %42 = sbr.rel (0) target = $region13
    $region12: #{tpu_custom_call.1} parent=1 // pred_region
      %44 = vsyncadd [#allocation7], 0
      %s45 = sshll.u32 %s2, 4
      %s46 = int_to_ptr.hbm [resolvable:$true] %s45
      %s47 = sshll.u32 [#allocation8], 4
      %s48 = int_to_ptr.vmem [resolvable:$true] %s47
      %53 = dma.hbm_to_vmem [thread:$0]  %s46, 2048, %s48, [#allocation7], 128, 128, 8
    $region13: #{tpu_custom_call.1} parent=1 // pred_fallthru
      _
    // Predicated region
    $region14: #{tpu_custom_call.1} parent=1 // pred_check
      _
    $region15: #{tpu_custom_call.1} parent=1 // pred_check_branch
      %55 = sbr.rel (0) target = $region17
    $region16: #{tpu_custom_call.1} parent=1 // pred_region
      %57 = dma.done [#allocation4], 4096
    $region17: #{tpu_custom_call.1} parent=1 // pred_fallthru
      _
    // Predicated region
    $region18: #{tpu_custom_call.1} parent=1 // pred_check
      _
    $region19: #{tpu_custom_call.1} parent=1 // pred_check_branch
      %59 = sbr.rel (0) target = $region21
    $region20: #{tpu_custom_call.1} parent=1 // pred_region
      %61 = dma.done [#allocation7], 2048
    $region21: #{tpu_custom_call.1} parent=1 // pred_fallthru
      _
    // Predicated region
    $region22: #{tpu_custom_call.1} parent=1 // pred_check
      _
    $region23: #{tpu_custom_call.1} parent=1 // pred_check_branch
      %63 = sbr.rel (0) target = $region25
    $region24: #{tpu_custom_call.1} parent=1 // pred_region
      %65 = dma.done [#allocation7], 2048
    $region25: #{tpu_custom_call.1} parent=1 // pred_fallthru
      _
    %s66 = smul.u32 0, 256
    %s67 = sshra.s32 %s66, 3
    %s68 = sand.u32 %s66, 7
    %s69 = smul.addr %s67, 4
    %s70 = scalar_lea.vmem [#allocation6], %s69
    %v71 = vld [vmem:[%s70] sm:$0xf]
    %v72 = vld [vmem:[%s70 + $0x4] sm:$0xf]
    %v73 = vld [vmem:[%s70 + $0x8] sm:$0xf]
    %v74 = vld [vmem:[%s70 + $0xc] sm:$0xf]
    %v75 = vld [vmem:[%s70 + $0x10] sm:$0xf]
    %v76 = vld [vmem:[%s70 + $0x14] sm:$0xf]
    %v77 = vld [vmem:[%s70 + $0x18] sm:$0xf]
    %v78 = vld [vmem:[%s70 + $0x1c] sm:$0xf]
    %v79 = vld [vmem:[%s70 + $0x20] sm:$0xf]
    %v80 = vld [vmem:[%s70 + $0x24] sm:$0xf]
    %v81 = vld [vmem:[%s70 + $0x28] sm:$0xf]
    %v82 = vld [vmem:[%s70 + $0x2c] sm:$0xf]
    %v83 = vld [vmem:[%s70 + $0x30] sm:$0xf]
    %v84 = vld [vmem:[%s70 + $0x34] sm:$0xf]
    %v85 = vld [vmem:[%s70 + $0x38] sm:$0xf]
    %v86 = vld [vmem:[%s70 + $0x3c] sm:$0xf]
    %v87 = vld [vmem:[%s70 + $0x40] sm:$0xf]
    %v88 = vld [vmem:[%s70 + $0x44] sm:$0xf]
    %v89 = vld [vmem:[%s70 + $0x48] sm:$0xf]
    %v90 = vld [vmem:[%s70 + $0x4c] sm:$0xf]
    %v91 = vld [vmem:[%s70 + $0x50] sm:$0xf]
    %v92 = vld [vmem:[%s70 + $0x54] sm:$0xf]
    %v93 = vld [vmem:[%s70 + $0x58] sm:$0xf]
    %v94 = vld [vmem:[%s70 + $0x5c] sm:$0xf]
    %v95 = vld [vmem:[%s70 + $0x60] sm:$0xf]
    %v96 = vld [vmem:[%s70 + $0x64] sm:$0xf]
    %v97 = vld [vmem:[%s70 + $0x68] sm:$0xf]
    %v98 = vld [vmem:[%s70 + $0x6c] sm:$0xf]
    %v99 = vld [vmem:[%s70 + $0x70] sm:$0xf]
    %v100 = vld [vmem:[%s70 + $0x74] sm:$0xf]
    %v101 = vld [vmem:[%s70 + $0x78] sm:$0xf]
    %v102 = vld [vmem:[%s70 + $0x7c] sm:$0xf]
    %v103 = vld [vmem:[#allocation3] sm:$0xff]
    %v104 = vld [vmem:[#allocation3 + $0x8] sm:$0xff]
    %v105 = vld [vmem:[#allocation3 + $0x10] sm:$0xff]
    %v106 = vld [vmem:[#allocation3 + $0x18] sm:$0xff]
    %v107 = vld [vmem:[#allocation3 + $0x20] sm:$0xff]
    %v108 = vld [vmem:[#allocation3 + $0x28] sm:$0xff]
    %v109 = vld [vmem:[#allocation3 + $0x30] sm:$0xff]
    %v110 = vld [vmem:[#allocation3 + $0x38] sm:$0xff]
    %v111 = vld [vmem:[#allocation3 + $0x40] sm:$0xff]
    %v112 = vld [vmem:[#allocation3 + $0x48] sm:$0xff]
    %v113 = vld [vmem:[#allocation3 + $0x50] sm:$0xff]
    %v114 = vld [vmem:[#allocation3 + $0x58] sm:$0xff]
    %v115 = vld [vmem:[#allocation3 + $0x60] sm:$0xff]
    %v116 = vld [vmem:[#allocation3 + $0x68] sm:$0xff]
    %v117 = vld [vmem:[#allocation3 + $0x70] sm:$0xff]
    %v118 = vld [vmem:[#allocation3 + $0x78] sm:$0xff]
    %v119 = vld [vmem:[#allocation3 + $0x80] sm:$0xff]
    %v120 = vld [vmem:[#allocation3 + $0x88] sm:$0xff]
    %v121 = vld [vmem:[#allocation3 + $0x90] sm:$0xff]
    %v122 = vld [vmem:[#allocation3 + $0x98] sm:$0xff]
    %v123 = vld [vmem:[#allocation3 + $0xa0] sm:$0xff]
    %v124 = vld [vmem:[#allocation3 + $0xa8] sm:$0xff]
    %v125 = vld [vmem:[#allocation3 + $0xb0] sm:$0xff]
    %v126 = vld [vmem:[#allocation3 + $0xb8] sm:$0xff]
    %v127 = vld [vmem:[#allocation3 + $0xc0] sm:$0xff]
    %v128 = vld [vmem:[#allocation3 + $0xc8] sm:$0xff]
    %v129 = vld [vmem:[#allocation3 + $0xd0] sm:$0xff]
    %v130 = vld [vmem:[#allocation3 + $0xd8] sm:$0xff]
    %v131 = vld [vmem:[#allocation3 + $0xe0] sm:$0xff]
    %v132 = vld [vmem:[#allocation3 + $0xe8] sm:$0xff]
    %v133 = vld [vmem:[#allocation3 + $0xf0] sm:$0xff]
    %v134 = vld [vmem:[#allocation3 + $0xf8] sm:$0xff]
    %v167 = vunpack.c.l.b16 %v103
    %v168 = vunpack.c.h.b16 %v103
    %v169 = vunpack.c.l.b16 %v104
    %v170 = vunpack.c.h.b16 %v104
    %v171 = vunpack.c.l.b16 %v105
    %v172 = vunpack.c.h.b16 %v105
    %v173 = vunpack.c.l.b16 %v106
    %v174 = vunpack.c.h.b16 %v106
    %v175 = vunpack.c.l.b16 %v107
    %v176 = vunpack.c.h.b16 %v107
    %v177 = vunpack.c.l.b16 %v108
    %v178 = vunpack.c.h.b16 %v108
    %v179 = vunpack.c.l.b16 %v109
    %v180 = vunpack.c.h.b16 %v109
    %v181 = vunpack.c.l.b16 %v110
    %v182 = vunpack.c.h.b16 %v110
    %v183 = vunpack.c.l.b16 %v111
    %v184 = vunpack.c.h.b16 %v111
    %v185 = vunpack.c.l.b16 %v112
    %v186 = vunpack.c.h.b16 %v112
    %v187 = vunpack.c.l.b16 %v113
    %v188 = vunpack.c.h.b16 %v113
    %v189 = vunpack.c.l.b16 %v114
    %v190 = vunpack.c.h.b16 %v114
    %v191 = vunpack.c.l.b16 %v115
    %v192 = vunpack.c.h.b16 %v115
    %v193 = vunpack.c.l.b16 %v116
    %v194 = vunpack.c.h.b16 %v116
    %v195 = vunpack.c.l.b16 %v117
    %v196 = vunpack.c.h.b16 %v117
    %v197 = vunpack.c.l.b16 %v118
    %v198 = vunpack.c.h.b16 %v118
    %v199 = vunpack.c.l.b16 %v119
    %v200 = vunpack.c.h.b16 %v119
    %v201 = vunpack.c.l.b16 %v120
    %v202 = vunpack.c.h.b16 %v120
    %v203 = vunpack.c.l.b16 %v121
    %v204 = vunpack.c.h.b16 %v121
    %v205 = vunpack.c.l.b16 %v122
    %v206 = vunpack.c.h.b16 %v122
    %v207 = vunpack.c.l.b16 %v123
    %v208 = vunpack.c.h.b16 %v123
    %v209 = vunpack.c.l.b16 %v124
    %v210 = vunpack.c.h.b16 %v124
    %v211 = vunpack.c.l.b16 %v125
    %v212 = vunpack.c.h.b16 %v125
    %v213 = vunpack.c.l.b16 %v126
    %v214 = vunpack.c.h.b16 %v126
    %v215 = vunpack.c.l.b16 %v127
    %v216 = vunpack.c.h.b16 %v127
    %v217 = vunpack.c.l.b16 %v128
    %v218 = vunpack.c.h.b16 %v128
    %v219 = vunpack.c.l.b16 %v129
    %v220 = vunpack.c.h.b16 %v129
    %v221 = vunpack.c.l.b16 %v130
    %v222 = vunpack.c.h.b16 %v130
    %v223 = vunpack.c.l.b16 %v131
    %v224 = vunpack.c.h.b16 %v131
    %v225 = vunpack.c.l.b16 %v132
    %v226 = vunpack.c.h.b16 %v132
    %v227 = vunpack.c.l.b16 %v133
    %v228 = vunpack.c.h.b16 %v133
    %v229 = vunpack.c.l.b16 %v134
    %v230 = vunpack.c.h.b16 %v134
    %v231 = vpack.c.b16 %v169, %v167
    %v232 = vpack.c.b16 %v170, %v168
    %v233 = vpack.c.b16 %v173, %v171
    %v234 = vpack.c.b16 %v174, %v172
    %v235 = vpack.c.b16 %v177, %v175
    %v236 = vpack.c.b16 %v178, %v176
    %v237 = vpack.c.b16 %v181, %v179
    %v238 = vpack.c.b16 %v182, %v180
    %v239 = vpack.c.b16 %v185, %v183
    %v240 = vpack.c.b16 %v186, %v184
    %v241 = vpack.c.b16 %v189, %v187
    %v242 = vpack.c.b16 %v190, %v188
    %v243 = vpack.c.b16 %v193, %v191
    %v244 = vpack.c.b16 %v194, %v192
    %v245 = vpack.c.b16 %v197, %v195
    %v246 = vpack.c.b16 %v198, %v196
    %v247 = vpack.c.b16 %v201, %v199
    %v248 = vpack.c.b16 %v202, %v200
    %v249 = vpack.c.b16 %v205, %v203
    %v250 = vpack.c.b16 %v206, %v204
    %v251 = vpack.c.b16 %v209, %v207
    %v252 = vpack.c.b16 %v210, %v208
    %v253 = vpack.c.b16 %v213, %v211
    %v254 = vpack.c.b16 %v214, %v212
    %v255 = vpack.c.b16 %v217, %v215
    %v256 = vpack.c.b16 %v218, %v216
    %v257 = vpack.c.b16 %v221, %v219
    %v258 = vpack.c.b16 %v222, %v220
    %v259 = vpack.c.b16 %v225, %v223
    %v260 = vpack.c.b16 %v226, %v224
    %v261 = vpack.c.b16 %v229, %v227
    %v262 = vpack.c.b16 %v230, %v228
    %v327 = vunpack.c.l.b16 %v71
    %v328 = vunpack.c.l.b16 %v72
    %v329 = vunpack.c.l.b16 %v73
    %v330 = vunpack.c.l.b16 %v74
    %v331 = vunpack.c.l.b16 %v75
    %v332 = vunpack.c.l.b16 %v76
    %v333 = vunpack.c.l.b16 %v77
    %v334 = vunpack.c.l.b16 %v78
    %v335 = vunpack.c.l.b16 %v79
    %v336 = vunpack.c.l.b16 %v80
    %v337 = vunpack.c.l.b16 %v81
    %v338 = vunpack.c.l.b16 %v82
    %v339 = vunpack.c.l.b16 %v83
    %v340 = vunpack.c.l.b16 %v84
    %v341 = vunpack.c.l.b16 %v85
    %v342 = vunpack.c.l.b16 %v86
    %v343 = vunpack.c.l.b16 %v87
    %v344 = vunpack.c.l.b16 %v88
    %v345 = vunpack.c.l.b16 %v89
    %v346 = vunpack.c.l.b16 %v90
    %v347 = vunpack.c.l.b16 %v91
    %v348 = vunpack.c.l.b16 %v92
    %v349 = vunpack.c.l.b16 %v93
    %v350 = vunpack.c.l.b16 %v94
    %v351 = vunpack.c.l.b16 %v95
    %v352 = vunpack.c.l.b16 %v96
    %v353 = vunpack.c.l.b16 %v97
    %v354 = vunpack.c.l.b16 %v98
    %v355 = vunpack.c.l.b16 %v99
    %v356 = vunpack.c.l.b16 %v100
    %v357 = vunpack.c.l.b16 %v101
    %v358 = vunpack.c.l.b16 %v102
    %v359 = vpack.c.b16 %v328, %v327
    %v360 = vpack.c.b16 %v330, %v329
    %v361 = vpack.c.b16 %v332, %v331
    %v362 = vpack.c.b16 %v334, %v333
    %v363 = vpack.c.b16 %v336, %v335
    %v364 = vpack.c.b16 %v338, %v337
    %v365 = vpack.c.b16 %v340, %v339
    %v366 = vpack.c.b16 %v342, %v341
    %v367 = vpack.c.b16 %v344, %v343
    %v368 = vpack.c.b16 %v346, %v345
    %v369 = vpack.c.b16 %v348, %v347
    %v370 = vpack.c.b16 %v350, %v349
    %v371 = vpack.c.b16 %v352, %v351
    %v372 = vpack.c.b16 %v354, %v353
    %v373 = vpack.c.b16 %v356, %v355
    %v374 = vpack.c.b16 %v358, %v357
    %391 = vmatpush.bf16.msra.mxu0 %v366
    %392 = vmatpush.bf16.msra.mxu0 %v365
    %393 = vmatpush.bf16.msra.mxu0 %v364
    %394 = vmatpush.bf16.msra.mxu0 %v363
    %395 = vmatpush.bf16.msra.mxu0 %v362
    %396 = vmatpush.bf16.msra.mxu0 %v361
    %397 = vmatpush.bf16.msra.mxu0 %v360
    %398 = vmatpush.bf16.msra.mxu0 %v359
    %399 = vmatmul.bf16.gmra.mxu0 %v231
    %v400 = vpop.f32.mrf.mxu0
    %v401 = vadd.f32 0.0, %v400
    %v402 = vpop.f32.mrf.mxu0
    %v403 = vadd.f32 0.0, %v402
    %404 = vmatmul.bf16.gmra.mxu0 %v233
    %v405 = vpop.f32.mrf.mxu0
    %v406 = vadd.f32 0.0, %v405
    %v407 = vpop.f32.mrf.mxu0
    %v408 = vadd.f32 0.0, %v407
    %409 = vmatmul.bf16.gmra.mxu0 %v235
    %v410 = vpop.f32.mrf.mxu0
    %v411 = vadd.f32 0.0, %v410
    %v412 = vpop.f32.mrf.mxu0
    %v413 = vadd.f32 0.0, %v412
    %414 = vmatmul.bf16.gmra.mxu0 %v237
    %v415 = vpop.f32.mrf.mxu0
    %v416 = vadd.f32 0.0, %v415
    %v417 = vpop.f32.mrf.mxu0
    %v418 = vadd.f32 0.0, %v417
    %419 = vmatmul.bf16.gmra.mxu0 %v239
    %v420 = vpop.f32.mrf.mxu0
    %v421 = vadd.f32 0.0, %v420
    %v422 = vpop.f32.mrf.mxu0
    %v423 = vadd.f32 0.0, %v422
    %424 = vmatmul.bf16.gmra.mxu0 %v241
    %v425 = vpop.f32.mrf.mxu0
    %v426 = vadd.f32 0.0, %v425
    %v427 = vpop.f32.mrf.mxu0
    %v428 = vadd.f32 0.0, %v427
    %429 = vmatmul.bf16.gmra.mxu0 %v243
    %v430 = vpop.f32.mrf.mxu0
    %v431 = vadd.f32 0.0, %v430
    %v432 = vpop.f32.mrf.mxu0
    %v433 = vadd.f32 0.0, %v432
    %434 = vmatmul.bf16.gmra.mxu0 %v245
    %v435 = vpop.f32.mrf.mxu0
    %v436 = vadd.f32 0.0, %v435
    %v437 = vpop.f32.mrf.mxu0
    %v438 = vadd.f32 0.0, %v437
    %439 = vmatmul.bf16.gmra.mxu0 %v247
    %v440 = vpop.f32.mrf.mxu0
    %v441 = vadd.f32 0.0, %v440
    %v442 = vpop.f32.mrf.mxu0
    %v443 = vadd.f32 0.0, %v442
    %444 = vmatmul.bf16.gmra.mxu0 %v249
    %v445 = vpop.f32.mrf.mxu0
    %v446 = vadd.f32 0.0, %v445
    %v447 = vpop.f32.mrf.mxu0
    %v448 = vadd.f32 0.0, %v447
    %449 = vmatmul.bf16.gmra.mxu0 %v251
    %v450 = vpop.f32.mrf.mxu0
    %v451 = vadd.f32 0.0, %v450
    %v452 = vpop.f32.mrf.mxu0
    %v453 = vadd.f32 0.0, %v452
    %454 = vmatmul.bf16.gmra.mxu0 %v253
    %v455 = vpop.f32.mrf.mxu0
    %v456 = vadd.f32 0.0, %v455
    %v457 = vpop.f32.mrf.mxu0
    %v458 = vadd.f32 0.0, %v457
    %459 = vmatmul.bf16.gmra.mxu0 %v255
    %v460 = vpop.f32.mrf.mxu0
    %v461 = vadd.f32 0.0, %v460
    %v462 = vpop.f32.mrf.mxu0
    %v463 = vadd.f32 0.0, %v462
    %464 = vmatmul.bf16.gmra.mxu0 %v257
    %v465 = vpop.f32.mrf.mxu0
    %v466 = vadd.f32 0.0, %v465
    %v467 = vpop.f32.mrf.mxu0
    %v468 = vadd.f32 0.0, %v467
    %469 = vmatmul.bf16.gmra.mxu0 %v259
    %v470 = vpop.f32.mrf.mxu0
    %v471 = vadd.f32 0.0, %v470
    %v472 = vpop.f32.mrf.mxu0
    %v473 = vadd.f32 0.0, %v472
    %474 = vmatmul.bf16.gmra.mxu0 %v261
    %v475 = vpop.f32.mrf.mxu0
    %v476 = vadd.f32 0.0, %v475
    %v477 = vpop.f32.mrf.mxu0
    %v478 = vadd.f32 0.0, %v477
    %479 = vdwg.mxu0
    %480 = vmatpush.bf16.msra.mxu0 %v374
    %481 = vmatpush.bf16.msra.mxu0 %v373
    %482 = vmatpush.bf16.msra.mxu0 %v372
    %483 = vmatpush.bf16.msra.mxu0 %v371
    %484 = vmatpush.bf16.msra.mxu0 %v370
    %485 = vmatpush.bf16.msra.mxu0 %v369
    %486 = vmatpush.bf16.msra.mxu0 %v368
    %487 = vmatpush.bf16.msra.mxu0 %v367
    %488 = vmatmul.bf16.gmra.mxu0 %v232
    %v489 = vpop.f32.mrf.mxu0
    %v490 = vadd.f32 %v401, %v489
    %v491 = vpop.f32.mrf.mxu0
    %v492 = vadd.f32 %v403, %v491
    %493 = vmatmul.bf16.gmra.mxu0 %v234
    %v494 = vpop.f32.mrf.mxu0
    %v495 = vadd.f32 %v406, %v494
    %v496 = vpop.f32.mrf.mxu0
    %v497 = vadd.f32 %v408, %v496
    %498 = vmatmul.bf16.gmra.mxu0 %v236
    %v499 = vpop.f32.mrf.mxu0
    %v500 = vadd.f32 %v411, %v499
    %v501 = vpop.f32.mrf.mxu0
    %v502 = vadd.f32 %v413, %v501
    %503 = vmatmul.bf16.gmra.mxu0 %v238
    %v504 = vpop.f32.mrf.mxu0
    %v505 = vadd.f32 %v416, %v504
    %v506 = vpop.f32.mrf.mxu0
    %v507 = vadd.f32 %v418, %v506
    %508 = vmatmul.bf16.gmra.mxu0 %v240
    %v509 = vpop.f32.mrf.mxu0
    %v510 = vadd.f32 %v421, %v509
    %v511 = vpop.f32.mrf.mxu0
    %v512 = vadd.f32 %v423, %v511
    %513 = vmatmul.bf16.gmra.mxu0 %v242
    %v514 = vpop.f32.mrf.mxu0
    %v515 = vadd.f32 %v426, %v514
    %v516 = vpop.f32.mrf.mxu0
    %v517 = vadd.f32 %v428, %v516
    %518 = vmatmul.bf16.gmra.mxu0 %v244
    %v519 = vpop.f32.mrf.mxu0
    %v520 = vadd.f32 %v431, %v519
    %v521 = vpop.f32.mrf.mxu0
    %v522 = vadd.f32 %v433, %v521
    %523 = vmatmul.bf16.gmra.mxu0 %v246
    %v524 = vpop.f32.mrf.mxu0
    %v525 = vadd.f32 %v436, %v524
    %v526 = vpop.f32.mrf.mxu0
    %v527 = vadd.f32 %v438, %v526
    %528 = vmatmul.bf16.gmra.mxu0 %v248
    %v529 = vpop.f32.mrf.mxu0
    %v530 = vadd.f32 %v441, %v529
    %v531 = vpop.f32.mrf.mxu0
    %v532 = vadd.f32 %v443, %v531
    %533 = vmatmul.bf16.gmra.mxu0 %v250
    %v534 = vpop.f32.mrf.mxu0
    %v535 = vadd.f32 %v446, %v534
    %v536 = vpop.f32.mrf.mxu0
    %v537 = vadd.f32 %v448, %v536
    %538 = vmatmul.bf16.gmra.mxu0 %v252
    %v539 = vpop.f32.mrf.mxu0
    %v540 = vadd.f32 %v451, %v539
    %v541 = vpop.f32.mrf.mxu0
    %v542 = vadd.f32 %v453, %v541
    %543 = vmatmul.bf16.gmra.mxu0 %v254
    %v544 = vpop.f32.mrf.mxu0
    %v545 = vadd.f32 %v456, %v544
    %v546 = vpop.f32.mrf.mxu0
    %v547 = vadd.f32 %v458, %v546
    %548 = vmatmul.bf16.gmra.mxu0 %v256
    %v549 = vpop.f32.mrf.mxu0
    %v550 = vadd.f32 %v461, %v549
    %v551 = vpop.f32.mrf.mxu0
    %v552 = vadd.f32 %v463, %v551
    %553 = vmatmul.bf16.gmra.mxu0 %v258
    %v554 = vpop.f32.mrf.mxu0
    %v555 = vadd.f32 %v466, %v554
    %v556 = vpop.f32.mrf.mxu0
    %v557 = vadd.f32 %v468, %v556
    %558 = vmatmul.bf16.gmra.mxu0 %v260
    %v559 = vpop.f32.mrf.mxu0
    %v560 = vadd.f32 %v471, %v559
    %v561 = vpop.f32.mrf.mxu0
    %v562 = vadd.f32 %v473, %v561
    %563 = vmatmul.bf16.gmra.mxu0 %v262
    %v564 = vpop.f32.mrf.mxu0
    %v565 = vadd.f32 %v476, %v564
    %v566 = vpop.f32.mrf.mxu0
    %v567 = vadd.f32 %v478, %v566
    %568 = vdwg.mxu0
    %p569 = scmp.eq.s32.totalorder 0, 0
    // Predicated region
    $region26: #{tpu_custom_call.1} parent=1 // pred_check
      %p570 = pneg %p569
    $region27: #{tpu_custom_call.1} parent=1 // pred_check_branch
      %572 = sbr.rel (%p570) target = $region29
    $region28: #{tpu_custom_call.1} parent=1 // pred_region
      %573 = vst [vmem:[#allocation2] sm:$0xff] %v490
      %574 = vst [vmem:[#allocation2 + $0x8] sm:$0xff] %v492
      %575 = vst [vmem:[#allocation2 + $0x10] sm:$0xff] %v495
      %576 = vst [vmem:[#allocation2 + $0x18] sm:$0xff] %v497
      %577 = vst [vmem:[#allocation2 + $0x20] sm:$0xff] %v500
      %578 = vst [vmem:[#allocation2 + $0x28] sm:$0xff] %v502
      %579 = vst [vmem:[#allocation2 + $0x30] sm:$0xff] %v505
      %580 = vst [vmem:[#allocation2 + $0x38] sm:$0xff] %v507
      %581 = vst [vmem:[#allocation2 + $0x40] sm:$0xff] %v510
      %582 = vst [vmem:[#allocation2 + $0x48] sm:$0xff] %v512
      %583 = vst [vmem:[#allocation2 + $0x50] sm:$0xff] %v515
      %584 = vst [vmem:[#allocation2 + $0x58] sm:$0xff] %v517
      %585 = vst [vmem:[#allocation2 + $0x60] sm:$0xff] %v520
      %586 = vst [vmem:[#allocation2 + $0x68] sm:$0xff] %v522
      %587 = vst [vmem:[#allocation2 + $0x70] sm:$0xff] %v525
      %588 = vst [vmem:[#allocation2 + $0x78] sm:$0xff] %v527
      %589 = vst [vmem:[#allocation2 + $0x80] sm:$0xff] %v530
      %590 = vst [vmem:[#allocation2 + $0x88] sm:$0xff] %v532
      %591 = vst [vmem:[#allocation2 + $0x90] sm:$0xff] %v535
      %592 = vst [vmem:[#allocation2 + $0x98] sm:$0xff] %v537
      %593 = vst [vmem:[#allocation2 + $0xa0] sm:$0xff] %v540
      %594 = vst [vmem:[#allocation2 + $0xa8] sm:$0xff] %v542
      %595 = vst [vmem:[#allocation2 + $0xb0] sm:$0xff] %v545
      %596 = vst [vmem:[#allocation2 + $0xb8] sm:$0xff] %v547
      %597 = vst [vmem:[#allocation2 + $0xc0] sm:$0xff] %v550
      %598 = vst [vmem:[#allocation2 + $0xc8] sm:$0xff] %v552
      %599 = vst [vmem:[#allocation2 + $0xd0] sm:$0xff] %v555
      %600 = vst [vmem:[#allocation2 + $0xd8] sm:$0xff] %v557
      %601 = vst [vmem:[#allocation2 + $0xe0] sm:$0xff] %v560
      %602 = vst [vmem:[#allocation2 + $0xe8] sm:$0xff] %v562
      %603 = vst [vmem:[#allocation2 + $0xf0] sm:$0xff] %v565
      %604 = vst [vmem:[#allocation2 + $0xf8] sm:$0xff] %v567
    $region29: #{tpu_custom_call.1} parent=1 // pred_fallthru
      _
    %p605 = scmp.gt.s32.totalorder 0, 0
    // Predicated region
    $region30: #{tpu_custom_call.1} parent=1 // pred_check
      %p606 = pneg %p605
    $region31: #{tpu_custom_call.1} parent=1 // pred_check_branch
      %608 = sbr.rel (%p606) target = $region33
    $region32: #{tpu_custom_call.1} parent=1 // pred_region
      %v609 = vld [vmem:[#allocation2] sm:$0xff]
      %v610 = vld [vmem:[#allocation2 + $0x8] sm:$0xff]
      %v611 = vld [vmem:[#allocation2 + $0x10] sm:$0xff]
      %v612 = vld [vmem:[#allocation2 + $0x18] sm:$0xff]
      %v613 = vld [vmem:[#allocation2 + $0x20] sm:$0xff]
      %v614 = vld [vmem:[#allocation2 + $0x28] sm:$0xff]
      %v615 = vld [vmem:[#allocation2 + $0x30] sm:$0xff]
      %v616 = vld [vmem:[#allocation2 + $0x38] sm:$0xff]
      %v617 = vld [vmem:[#allocation2 + $0x40] sm:$0xff]
      %v618 = vld [vmem:[#allocation2 + $0x48] sm:$0xff]
      %v619 = vld [vmem:[#allocation2 + $0x50] sm:$0xff]
      %v620 = vld [vmem:[#allocation2 + $0x58] sm:$0xff]
      %v621 = vld [vmem:[#allocation2 + $0x60] sm:$0xff]
      %v622 = vld [vmem:[#allocation2 + $0x68] sm:$0xff]
      %v623 = vld [vmem:[#allocation2 + $0x70] sm:$0xff]
      %v624 = vld [vmem:[#allocation2 + $0x78] sm:$0xff]
      %v625 = vld [vmem:[#allocation2 + $0x80] sm:$0xff]
      %v626 = vld [vmem:[#allocation2 + $0x88] sm:$0xff]
      %v627 = vld [vmem:[#allocation2 + $0x90] sm:$0xff]
      %v628 = vld [vmem:[#allocation2 + $0x98] sm:$0xff]
      %v629 = vld [vmem:[#allocation2 + $0xa0] sm:$0xff]
      %v630 = vld [vmem:[#allocation2 + $0xa8] sm:$0xff]
      %v631 = vld [vmem:[#allocation2 + $0xb0] sm:$0xff]
      %v632 = vld [vmem:[#allocation2 + $0xb8] sm:$0xff]
      %v633 = vld [vmem:[#allocation2 + $0xc0] sm:$0xff]
      %v634 = vld [vmem:[#allocation2 + $0xc8] sm:$0xff]
      %v635 = vld [vmem:[#allocation2 + $0xd0] sm:$0xff]
      %v636 = vld [vmem:[#allocation2 + $0xd8] sm:$0xff]
      %v637 = vld [vmem:[#allocation2 + $0xe0] sm:$0xff]
      %v638 = vld [vmem:[#allocation2 + $0xe8] sm:$0xff]
      %v639 = vld [vmem:[#allocation2 + $0xf0] sm:$0xff]
      %v640 = vld [vmem:[#allocation2 + $0xf8] sm:$0xff]
      %v641 = vadd.f32 %v609, %v490
      %v642 = vadd.f32 %v610, %v492
      %v643 = vadd.f32 %v611, %v495
      %v644 = vadd.f32 %v612, %v497
      %v645 = vadd.f32 %v613, %v500
      %v646 = vadd.f32 %v614, %v502
      %v647 = vadd.f32 %v615, %v505
      %v648 = vadd.f32 %v616, %v507
      %v649 = vadd.f32 %v617, %v510
      %v650 = vadd.f32 %v618, %v512
      %v651 = vadd.f32 %v619, %v515
      %v652 = vadd.f32 %v620, %v517
      %v653 = vadd.f32 %v621, %v520
      %v654 = vadd.f32 %v622, %v522
      %v655 = vadd.f32 %v623, %v525
      %v656 = vadd.f32 %v624, %v527
      %v657 = vadd.f32 %v625, %v530
      %v658 = vadd.f32 %v626, %v532
      %v659 = vadd.f32 %v627, %v535
      %v660 = vadd.f32 %v628, %v537
      %v661 = vadd.f32 %v629, %v540
      %v662 = vadd.f32 %v630, %v542
      %v663 = vadd.f32 %v631, %v545
      %v664 = vadd.f32 %v632, %v547
      %v665 = vadd.f32 %v633, %v550
      %v666 = vadd.f32 %v634, %v552
      %v667 = vadd.f32 %v635, %v555
      %v668 = vadd.f32 %v636, %v557
      %v669 = vadd.f32 %v637, %v560
      %v670 = vadd.f32 %v638, %v562
      %v671 = vadd.f32 %v639, %v565
      %v672 = vadd.f32 %v640, %v567
      %673 = vst [vmem:[#allocation2] sm:$0xff] %v641
      %674 = vst [vmem:[#allocation2 + $0x8] sm:$0xff] %v642
      %675 = vst [vmem:[#allocation2 + $0x10] sm:$0xff] %v643
      %676 = vst [vmem:[#allocation2 + $0x18] sm:$0xff] %v644
      %677 = vst [vmem:[#allocation2 + $0x20] sm:$0xff] %v645
      %678 = vst [vmem:[#allocation2 + $0x28] sm:$0xff] %v646
      %679 = vst [vmem:[#allocation2 + $0x30] sm:$0xff] %v647
      %680 = vst [vmem:[#allocation2 + $0x38] sm:$0xff] %v648
      %681 = vst [vmem:[#allocation2 + $0x40] sm:$0xff] %v649
      %682 = vst [vmem:[#allocation2 + $0x48] sm:$0xff] %v650
      %683 = vst [vmem:[#allocation2 + $0x50] sm:$0xff] %v651
      %684 = vst [vmem:[#allocation2 + $0x58] sm:$0xff] %v652
      %685 = vst [vmem:[#allocation2 + $0x60] sm:$0xff] %v653
      %686 = vst [vmem:[#allocation2 + $0x68] sm:$0xff] %v654
      %687 = vst [vmem:[#allocation2 + $0x70] sm:$0xff] %v655
      %688 = vst [vmem:[#allocation2 + $0x78] sm:$0xff] %v656
      %689 = vst [vmem:[#allocation2 + $0x80] sm:$0xff] %v657
      %690 = vst [vmem:[#allocation2 + $0x88] sm:$0xff] %v658
      %691 = vst [vmem:[#allocation2 + $0x90] sm:$0xff] %v659
      %692 = vst [vmem:[#allocation2 + $0x98] sm:$0xff] %v660
      %693 = vst [vmem:[#allocation2 + $0xa0] sm:$0xff] %v661
      %694 = vst [vmem:[#allocation2 + $0xa8] sm:$0xff] %v662
      %695 = vst [vmem:[#allocation2 + $0xb0] sm:$0xff] %v663
      %696 = vst [vmem:[#allocation2 + $0xb8] sm:$0xff] %v664
      %697 = vst [vmem:[#allocation2 + $0xc0] sm:$0xff] %v665
      %698 = vst [vmem:[#allocation2 + $0xc8] sm:$0xff] %v666
      %699 = vst [vmem:[#allocation2 + $0xd0] sm:$0xff] %v667
      %700 = vst [vmem:[#allocation2 + $0xd8] sm:$0xff] %v668
      %701 = vst [vmem:[#allocation2 + $0xe0] sm:$0xff] %v669
      %702 = vst [vmem:[#allocation2 + $0xe8] sm:$0xff] %v670
      %703 = vst [vmem:[#allocation2 + $0xf0] sm:$0xff] %v671
      %704 = vst [vmem:[#allocation2 + $0xf8] sm:$0xff] %v672
    $region33: #{tpu_custom_call.1} parent=1 // pred_fallthru
      _
    // Predicated region
    $region34: #{tpu_custom_call.1} parent=1 // pred_check
      %p705 = pneg %p569
    $region35: #{tpu_custom_call.1} parent=1 // pred_check_branch
      %707 = sbr.rel (%p705) target = $region37
    $region36: #{tpu_custom_call.1} parent=1 // pred_region
      %v708 = vld [vmem:[#allocation2] sm:$0xff]
      %v709 = vld [vmem:[#allocation2 + $0x8] sm:$0xff]
      %v710 = vld [vmem:[#allocation2 + $0x10] sm:$0xff]
      %v711 = vld [vmem:[#allocation2 + $0x18] sm:$0xff]
      %v712 = vld [vmem:[#allocation2 + $0x20] sm:$0xff]
      %v713 = vld [vmem:[#allocation2 + $0x28] sm:$0xff]
      %v714 = vld [vmem:[#allocation2 + $0x30] sm:$0xff]
      %v715 = vld [vmem:[#allocation2 + $0x38] sm:$0xff]
      %v716 = vld [vmem:[#allocation2 + $0x40] sm:$0xff]
      %v717 = vld [vmem:[#allocation2 + $0x48] sm:$0xff]
      %v718 = vld [vmem:[#allocation2 + $0x50] sm:$0xff]
      %v719 = vld [vmem:[#allocation2 + $0x58] sm:$0xff]
      %v720 = vld [vmem:[#allocation2 + $0x60] sm:$0xff]
      %v721 = vld [vmem:[#allocation2 + $0x68] sm:$0xff]
      %v722 = vld [vmem:[#allocation2 + $0x70] sm:$0xff]
      %v723 = vld [vmem:[#allocation2 + $0x78] sm:$0xff]
      %v724 = vld [vmem:[#allocation2 + $0x80] sm:$0xff]
      %v725 = vld [vmem:[#allocation2 + $0x88] sm:$0xff]
      %v726 = vld [vmem:[#allocation2 + $0x90] sm:$0xff]
      %v727 = vld [vmem:[#allocation2 + $0x98] sm:$0xff]
      %v728 = vld [vmem:[#allocation2 + $0xa0] sm:$0xff]
      %v729 = vld [vmem:[#allocation2 + $0xa8] sm:$0xff]
      %v730 = vld [vmem:[#allocation2 + $0xb0] sm:$0xff]
      %v731 = vld [vmem:[#allocation2 + $0xb8] sm:$0xff]
      %v732 = vld [vmem:[#allocation2 + $0xc0] sm:$0xff]
      %v733 = vld [vmem:[#allocation2 + $0xc8] sm:$0xff]
      %v734 = vld [vmem:[#allocation2 + $0xd0] sm:$0xff]
      %v735 = vld [vmem:[#allocation2 + $0xd8] sm:$0xff]
      %v736 = vld [vmem:[#allocation2 + $0xe0] sm:$0xff]
      %v737 = vld [vmem:[#allocation2 + $0xe8] sm:$0xff]
      %v738 = vld [vmem:[#allocation2 + $0xf0] sm:$0xff]
      %v739 = vld [vmem:[#allocation2 + $0xf8] sm:$0xff]
      %v740 = vld [vmem:[#allocation8] sm:$0xff]
      %v741 = vld [vmem:[#allocation8 + $0x8] sm:$0xff]
      %v742 = vld [vmem:[#allocation8 + $0x10] sm:$0xff]
      %v743 = vld [vmem:[#allocation8 + $0x18] sm:$0xff]
      %v744 = vld [vmem:[#allocation8 + $0x20] sm:$0xff]
      %v745 = vld [vmem:[#allocation8 + $0x28] sm:$0xff]
      %v746 = vld [vmem:[#allocation8 + $0x30] sm:$0xff]
      %v747 = vld [vmem:[#allocation8 + $0x38] sm:$0xff]
      %v748 = vld [vmem:[#allocation8 + $0x40] sm:$0xff]
      %v749 = vld [vmem:[#allocation8 + $0x48] sm:$0xff]
      %v750 = vld [vmem:[#allocation8 + $0x50] sm:$0xff]
      %v751 = vld [vmem:[#allocation8 + $0x58] sm:$0xff]
      %v752 = vld [vmem:[#allocation8 + $0x60] sm:$0xff]
      %v753 = vld [vmem:[#allocation8 + $0x68] sm:$0xff]
      %v754 = vld [vmem:[#allocation8 + $0x70] sm:$0xff]
      %v755 = vld [vmem:[#allocation8 + $0x78] sm:$0xff]
      %756 = vmatpush.msra.mxu0 %v755
      %757 = vmatpush.msra.mxu0 %v754
      %758 = vmatpush.msra.mxu0 %v753
      %759 = vmatpush.msra.mxu0 %v752
      %760 = vmatpush.msra.mxu0 %v751
      %761 = vmatpush.msra.mxu0 %v750
      %762 = vmatpush.msra.mxu0 %v749
      %763 = vmatpush.msra.mxu0 %v748
      %764 = vmatpush.msra.mxu0 %v747
      %765 = vmatpush.msra.mxu0 %v746
      %766 = vmatpush.msra.mxu0 %v745
      %767 = vmatpush.msra.mxu0 %v744
      %768 = vmatpush.msra.mxu0 %v743
      %769 = vmatpush.msra.mxu0 %v742
      %770 = vmatpush.msra.mxu0 %v741
      %771 = vmatpush.msra.mxu0 %v740
      %772 = vmatmul.f32.gmra.mxu0 %v708
      %v773 = vpop.f32.mrf.mxu0
      %v774 = vadd.f32 0.0, %v773
      %775 = vmatmul.f32.gmra.mxu0 %v709
      %v776 = vpop.f32.mrf.mxu0
      %v777 = vadd.f32 0.0, %v776
      %778 = vmatmul.f32.gmra.mxu0 %v710
      %v779 = vpop.f32.mrf.mxu0
      %v780 = vadd.f32 0.0, %v779
      %781 = vmatmul.f32.gmra.mxu0 %v711
      %v782 = vpop.f32.mrf.mxu0
      %v783 = vadd.f32 0.0, %v782
      %784 = vmatmul.f32.gmra.mxu0 %v712
      %v785 = vpop.f32.mrf.mxu0
      %v786 = vadd.f32 0.0, %v785
      %787 = vmatmul.f32.gmra.mxu0 %v713
      %v788 = vpop.f32.mrf.mxu0
      %v789 = vadd.f32 0.0, %v788
      %790 = vmatmul.f32.gmra.mxu0 %v714
      %v791 = vpop.f32.mrf.mxu0
      %v792 = vadd.f32 0.0, %v791
      %793 = vmatmul.f32.gmra.mxu0 %v715
      %v794 = vpop.f32.mrf.mxu0
      %v795 = vadd.f32 0.0, %v794
      %796 = vmatmul.f32.gmra.mxu0 %v716
      %v797 = vpop.f32.mrf.mxu0
      %v798 = vadd.f32 0.0, %v797
      %799 = vmatmul.f32.gmra.mxu0 %v717
      %v800 = vpop.f32.mrf.mxu0
      %v801 = vadd.f32 0.0, %v800
      %802 = vmatmul.f32.gmra.mxu0 %v718
      %v803 = vpop.f32.mrf.mxu0
      %v804 = vadd.f32 0.0, %v803
      %805 = vmatmul.f32.gmra.mxu0 %v719
      %v806 = vpop.f32.mrf.mxu0
      %v807 = vadd.f32 0.0, %v806
      %808 = vmatmul.f32.gmra.mxu0 %v720
      %v809 = vpop.f32.mrf.mxu0
      %v810 = vadd.f32 0.0, %v809
      %811 = vmatmul.f32.gmra.mxu0 %v721
      %v812 = vpop.f32.mrf.mxu0
      %v813 = vadd.f32 0.0, %v812
      %814 = vmatmul.f32.gmra.mxu0 %v722
      %v815 = vpop.f32.mrf.mxu0
      %v816 = vadd.f32 0.0, %v815
      %817 = vmatmul.f32.gmra.mxu0 %v723
      %v818 = vpop.f32.mrf.mxu0
      %v819 = vadd.f32 0.0, %v818
      %820 = vmatmul.f32.gmra.mxu0 %v724
      %v821 = vpop.f32.mrf.mxu0
      %v822 = vadd.f32 0.0, %v821
      %823 = vmatmul.f32.gmra.mxu0 %v725
      %v824 = vpop.f32.mrf.mxu0
      %v825 = vadd.f32 0.0, %v824
      %826 = vmatmul.f32.gmra.mxu0 %v726
      %v827 = vpop.f32.mrf.mxu0
      %v828 = vadd.f32 0.0, %v827
      %829 = vmatmul.f32.gmra.mxu0 %v727
      %v830 = vpop.f32.mrf.mxu0
      %v831 = vadd.f32 0.0, %v830
      %832 = vmatmul.f32.gmra.mxu0 %v728
      %v833 = vpop.f32.mrf.mxu0
      %v834 = vadd.f32 0.0, %v833
      %835 = vmatmul.f32.gmra.mxu0 %v729
      %v836 = vpop.f32.mrf.mxu0
      %v837 = vadd.f32 0.0, %v836
      %838 = vmatmul.f32.gmra.mxu0 %v730
      %v839 = vpop.f32.mrf.mxu0
      %v840 = vadd.f32 0.0, %v839
      %841 = vmatmul.f32.gmra.mxu0 %v731
      %v842 = vpop.f32.mrf.mxu0
      %v843 = vadd.f32 0.0, %v842
      %844 = vmatmul.f32.gmra.mxu0 %v732
      %v845 = vpop.f32.mrf.mxu0
      %v846 = vadd.f32 0.0, %v845
      %847 = vmatmul.f32.gmra.mxu0 %v733
      %v848 = vpop.f32.mrf.mxu0
      %v849 = vadd.f32 0.0, %v848
      %850 = vmatmul.f32.gmra.mxu0 %v734
      %v851 = vpop.f32.mrf.mxu0
      %v852 = vadd.f32 0.0, %v851
      %853 = vmatmul.f32.gmra.mxu0 %v735
      %v854 = vpop.f32.mrf.mxu0
      %v855 = vadd.f32 0.0, %v854
      %856 = vmatmul.f32.gmra.mxu0 %v736
      %v857 = vpop.f32.mrf.mxu0
      %v858 = vadd.f32 0.0, %v857
      %859 = vmatmul.f32.gmra.mxu0 %v737
      %v860 = vpop.f32.mrf.mxu0
      %v861 = vadd.f32 0.0, %v860
      %862 = vmatmul.f32.gmra.mxu0 %v738
      %v863 = vpop.f32.mrf.mxu0
      %v864 = vadd.f32 0.0, %v863
      %865 = vmatmul.f32.gmra.mxu0 %v739
      %v866 = vpop.f32.mrf.mxu0
      %v867 = vadd.f32 0.0, %v866
      %868 = vdwg.mxu0
      %869 = vst [vmem:[#allocation9] sm:$0xff] %v774
      %870 = vst [vmem:[#allocation9 + $0x8] sm:$0xff] %v777
      %871 = vst [vmem:[#allocation9 + $0x10] sm:$0xff] %v780
      %872 = vst [vmem:[#allocation9 + $0x18] sm:$0xff] %v783
      %873 = vst [vmem:[#allocation9 + $0x20] sm:$0xff] %v786
      %874 = vst [vmem:[#allocation9 + $0x28] sm:$0xff] %v789
      %875 = vst [vmem:[#allocation9 + $0x30] sm:$0xff] %v792
      %876 = vst [vmem:[#allocation9 + $0x38] sm:$0xff] %v795
      %877 = vst [vmem:[#allocation9 + $0x40] sm:$0xff] %v798
      %878 = vst [vmem:[#allocation9 + $0x48] sm:$0xff] %v801
      %879 = vst [vmem:[#allocation9 + $0x50] sm:$0xff] %v804
      %880 = vst [vmem:[#allocation9 + $0x58] sm:$0xff] %v807
      %881 = vst [vmem:[#allocation9 + $0x60] sm:$0xff] %v810
      %882 = vst [vmem:[#allocation9 + $0x68] sm:$0xff] %v813
      %883 = vst [vmem:[#allocation9 + $0x70] sm:$0xff] %v816
      %884 = vst [vmem:[#allocation9 + $0x78] sm:$0xff] %v819
      %885 = vst [vmem:[#allocation9 + $0x80] sm:$0xff] %v822
      %886 = vst [vmem:[#allocation9 + $0x88] sm:$0xff] %v825
      %887 = vst [vmem:[#allocation9 + $0x90] sm:$0xff] %v828
      %888 = vst [vmem:[#allocation9 + $0x98] sm:$0xff] %v831
      %889 = vst [vmem:[#allocation9 + $0xa0] sm:$0xff] %v834
      %890 = vst [vmem:[#allocation9 + $0xa8] sm:$0xff] %v837
      %891 = vst [vmem:[#allocation9 + $0xb0] sm:$0xff] %v840
      %892 = vst [vmem:[#allocation9 + $0xb8] sm:$0xff] %v843
      %893 = vst [vmem:[#allocation9 + $0xc0] sm:$0xff] %v846
      %894 = vst [vmem:[#allocation9 + $0xc8] sm:$0xff] %v849
      %895 = vst [vmem:[#allocation9 + $0xd0] sm:$0xff] %v852
      %896 = vst [vmem:[#allocation9 + $0xd8] sm:$0xff] %v855
      %897 = vst [vmem:[#allocation9 + $0xe0] sm:$0xff] %v858
      %898 = vst [vmem:[#allocation9 + $0xe8] sm:$0xff] %v861
      %899 = vst [vmem:[#allocation9 + $0xf0] sm:$0xff] %v864
      %900 = vst [vmem:[#allocation9 + $0xf8] sm:$0xff] %v867
      %v901 = vadd.f32 %v774, %v777
      %v902 = vadd.f32 %v901, %v780
      %v903 = vadd.f32 %v902, %v783
      %v904 = vadd.f32 %v903, %v786
      %v905 = vadd.f32 %v904, %v789
      %v906 = vadd.f32 %v905, %v792
      %v907 = vadd.f32 %v906, %v795
      %v908 = vadd.f32 %v907, %v798
      %v909 = vadd.f32 %v908, %v801
      %v910 = vadd.f32 %v909, %v804
      %v911 = vadd.f32 %v910, %v807
      %v912 = vadd.f32 %v911, %v810
      %v913 = vadd.f32 %v912, %v813
      %v914 = vadd.f32 %v913, %v816
      %v915 = vadd.f32 %v914, %v819
      %v916 = vadd.f32 %v915, %v822
      %v917 = vadd.f32 %v916, %v825
      %v918 = vadd.f32 %v917, %v828
      %v919 = vadd.f32 %v918, %v831
      %v920 = vadd.f32 %v919, %v834
      %v921 = vadd.f32 %v920, %v837
      %v922 = vadd.f32 %v921, %v840
      %v923 = vadd.f32 %v922, %v843
      %v924 = vadd.f32 %v923, %v846
      %v925 = vadd.f32 %v924, %v849
      %v926 = vadd.f32 %v925, %v852
      %v927 = vadd.f32 %v926, %v855
      %v928 = vadd.f32 %v927, %v858
      %v929 = vadd.f32 %v928, %v861
      %v930 = vadd.f32 %v929, %v864
      %v931 = vadd.f32 %v930, %v867
      %v932 = vrot.slane %v931, 4
      %v933 = vadd.f32 %v931, %v932
      %v934 = vrot.slane %v933, 2
      %v935 = vadd.f32 %v933, %v934
      %v936 = vrot.slane %v935, 1
      %v937 = vadd.f32 %v935, %v936
      %v938 = vmul.f32 %v774, %v774
      %v939 = vmul.f32 %v777, %v777
      %v940 = vmul.f32 %v780, %v780
      %v941 = vmul.f32 %v783, %v783
      %v942 = vmul.f32 %v786, %v786
      %v943 = vmul.f32 %v789, %v789
      %v944 = vmul.f32 %v792, %v792
      %v945 = vmul.f32 %v795, %v795
      %v946 = vmul.f32 %v798, %v798
      %v947 = vmul.f32 %v801, %v801
      %v948 = vmul.f32 %v804, %v804
      %v949 = vmul.f32 %v807, %v807
      %v950 = vmul.f32 %v810, %v810
      %v951 = vmul.f32 %v813, %v813
      %v952 = vmul.f32 %v816, %v816
      %v953 = vmul.f32 %v819, %v819
      %v954 = vmul.f32 %v822, %v822
      %v955 = vmul.f32 %v825, %v825
      %v956 = vmul.f32 %v828, %v828
      %v957 = vmul.f32 %v831, %v831
      %v958 = vmul.f32 %v834, %v834
      %v959 = vmul.f32 %v837, %v837
      %v960 = vmul.f32 %v840, %v840
      %v961 = vmul.f32 %v843, %v843
      %v962 = vmul.f32 %v846, %v846
      %v963 = vmul.f32 %v849, %v849
      %v964 = vmul.f32 %v852, %v852
      %v965 = vmul.f32 %v855, %v855
      %v966 = vmul.f32 %v858, %v858
      %v967 = vmul.f32 %v861, %v861
      %v968 = vmul.f32 %v864, %v864
      %v969 = vmul.f32 %v867, %v867
      %v970 = vadd.f32 %v938, %v939
      %v971 = vadd.f32 %v970, %v940
      %v972 = vadd.f32 %v971, %v941
      %v973 = vadd.f32 %v972, %v942
      %v974 = vadd.f32 %v973, %v943
      %v975 = vadd.f32 %v974, %v944
      %v976 = vadd.f32 %v975, %v945
      %v977 = vadd.f32 %v976, %v946
      %v978 = vadd.f32 %v977, %v947
      %v979 = vadd.f32 %v978, %v948
      %v980 = vadd.f32 %v979, %v949
      %v981 = vadd.f32 %v980, %v950
      %v982 = vadd.f32 %v981, %v951
      %v983 = vadd.f32 %v982, %v952
      %v984 = vadd.f32 %v983, %v953
      %v985 = vadd.f32 %v984, %v954
      %v986 = vadd.f32 %v985, %v955
      %v987 = vadd.f32 %v986, %v956
      %v988 = vadd.f32 %v987, %v957
      %v989 = vadd.f32 %v988, %v958
      %v990 = vadd.f32 %v989, %v959
      %v991 = vadd.f32 %v990, %v960
      %v992 = vadd.f32 %v991, %v961
      %v993 = vadd.f32 %v992, %v962
      %v994 = vadd.f32 %v993, %v963
      %v995 = vadd.f32 %v994, %v964
      %v996 = vadd.f32 %v995, %v965
      %v997 = vadd.f32 %v996, %v966
      %v998 = vadd.f32 %v997, %v967
      %v999 = vadd.f32 %v998, %v968
      %v1000 = vadd.f32 %v999, %v969
      %v1001 = vrot.slane %v1000, 4
      %v1002 = vadd.f32 %v1000, %v1001
      %v1003 = vrot.slane %v1002, 2
      %v1004 = vadd.f32 %v1002, %v1003
      %v1005 = vrot.slane %v1004, 1
      %v1006 = vadd.f32 %v1004, %v1005
      %1007 = vst [vmem:[#allocation10] sm:$0xff] %v937
      %1008 = vst [vmem:[#allocation12] sm:$0xff] %v1006
    $region37: #{tpu_custom_call.1} parent=1 // pred_fallthru
      _
    // Predicated region
    $region38: #{tpu_custom_call.1} parent=1 // pred_check
      _
    $region39: #{tpu_custom_call.1} parent=1 // pred_check_branch
      %1010 = sbr.rel (0) target = $region41
    $region40: #{tpu_custom_call.1} parent=1 // pred_region
      %1012 = vsyncadd [#allocation5], 0
      %s1013 = sshll.u32 [#allocation9], 4
      %s1014 = int_to_ptr.vmem [resolvable:$true] %s1013
      %s1015 = sshll.u32 %s3, 4
      %s1016 = int_to_ptr.hbm [resolvable:$true] %s1015
      %1021 = dma.vmem_to_hbm [thread:$0]  %s1014, 4096, %s1016, [#allocation5], 128, 128, 8
    $region41: #{tpu_custom_call.1} parent=1 // pred_fallthru
      _
    // Predicated region
    $region42: #{tpu_custom_call.1} parent=1 // pred_check
      _
    $region43: #{tpu_custom_call.1} parent=1 // pred_check_branch
      %1023 = sbr.rel (0) target = $region45
    $region44: #{tpu_custom_call.1} parent=1 // pred_region
      %1025 = vsyncadd [#allocation11], 0
      %s1027 = sshll.u32 [#allocation10], 4
      %s1028 = int_to_ptr.vmem [resolvable:$true] %s1027
      %s1029 = sshll.u32 %s4, 4
      %s1030 = int_to_ptr.hbm [resolvable:$true] %s1029
      %1032 = dma.vmem_to_hbm [thread:$0]  %s1028, 128, %s1030, [#allocation11]
    $region45: #{tpu_custom_call.1} parent=1 // pred_fallthru
      _
    // Predicated region
    $region46: #{tpu_custom_call.1} parent=1 // pred_check
      _
    $region47: #{tpu_custom_call.1} parent=1 // pred_check_branch
      %1034 = sbr.rel (0) target = $region49
    $region48: #{tpu_custom_call.1} parent=1 // pred_region
      %1036 = vsyncadd [#allocation11], 0
      %s1038 = sshll.u32 [#allocation12], 4
      %s1039 = int_to_ptr.vmem [resolvable:$true] %s1038
      %s1040 = sshll.u32 %s5, 4
      %s1041 = int_to_ptr.hbm [resolvable:$true] %s1040
      %1043 = dma.vmem_to_hbm [thread:$0]  %s1039, 128, %s1041, [#allocation11]
    $region49: #{tpu_custom_call.1} parent=1 // pred_fallthru
      _
    // Predicated region
    $region50: #{tpu_custom_call.1} parent=1 // pred_check
      _
    $region51: #{tpu_custom_call.1} parent=1 // pred_check_branch
      %1045 = sbr.rel (0) target = $region53
    $region52: #{tpu_custom_call.1} parent=1 // pred_region
      %1047 = dma.done [#allocation5], 4096
    $region53: #{tpu_custom_call.1} parent=1 // pred_fallthru
      _
    // Predicated region
    $region54: #{tpu_custom_call.1} parent=1 // pred_check
      _
    $region55: #{tpu_custom_call.1} parent=1 // pred_check_branch
      %1049 = sbr.rel (0) target = $region57
    $region56: #{tpu_custom_call.1} parent=1 // pred_region
      %1051 = dma.done [#allocation11], 128
    $region57: #{tpu_custom_call.1} parent=1 // pred_fallthru
      _
    // Predicated region
    $region58: #{tpu_custom_call.1} parent=1 // pred_check
      _
    $region59: #{tpu_custom_call.1} parent=1 // pred_check_branch
      %1053 = sbr.rel (0) target = $region61
    $region60: #{tpu_custom_call.1} parent=1 // pred_region
      %1055 = dma.done [#allocation11], 128
    $region61: #{tpu_custom_call.1} parent=1 // pred_fallthru
      _
    %1056 = vsyncpa [#allocation4], 1
    %1057 = vsyncpa [#allocation7], 1
    %1058 = vsyncpa [#allocation5], 1
    %1059 = vsyncpa [#allocation11], 1

</llo_original>
